<compile_context>
chip_gen: v7x
topology: tpu7x:2x2x1
jax: 0.10.0
libtpu: 0.0.40
codegen_flags: <defaults>
</compile_context>

<pallas_src>
import functools

import jax
import jax.numpy as jnp
import numpy as np
from jax.experimental import pallas as pl
from jax.experimental.pallas import tpu as pltpu


def _round_up(x, m):
    return ((x + m - 1) // m) * m


def _cdiv(a, b):
    return -(-a // b)


# ----------------------------------------------------------------------------
# Pallas kernel: fused build_inputs + 3-layer MLP
# ----------------------------------------------------------------------------
def coma_fused_kernel(feat_ref, pa_ref, wbase_ref, wpa_ref, b1a_ref,
                      w2_ref, b2_ref, w3_ref, b3_ref, q_ref, *, sub_rows):
    """One grid step: a block of `block_bt` (batch*time) rows, all agents.

    For every row and agent a it evaluates
        x    = [state, obs_a, mask_a * actions, last_actions, onehot(a)]
        q[a] = fc3(relu(fc2(relu(x @ W1 + b1))))
    without forming x:
        base   = [state|actions|last] @ [W1_s; W1_act; W1_last]   (shared)
        h1_a   = base + [obs_a|own_act_a] @ [W1_obs; -W1_act_a] + (b1 + W1_id[a])
        h1_all = stack_a(relu(h1_a))      -> one fc2, one fc3 per sub-tile.
    """
    block_bt = feat_ref.shape[0]
    n_agents = b1a_ref.shape[0]
    hidden = w2_ref.shape[0]
    n_actions = w3_ref.shape[1]
    n_sub = block_bt // sub_rows

    # Grid-/loop-invariant operands: load + broadcast once per grid step.
    w_base = wbase_ref[...]
    w2 = w2_ref[...]
    w3 = w3_ref[...]
    b1a = b1a_ref[...]
    b1_bc = [jnp.broadcast_to(b1a[a:a + 1, :], (sub_rows, hidden))
             for a in range(n_agents)]
    b2_bc = jnp.broadcast_to(b2_ref[...], (n_agents * sub_rows, hidden))
    b3_bc = jnp.broadcast_to(b3_ref[...], (n_agents * sub_rows, n_actions))

    @pl.loop(0, n_sub)
    def _(s):
        start = pl.multiple_of(s * sub_rows, sub_rows)
        rows = pl.ds(start, sub_rows)

        feat = feat_ref[rows, :]                              # (sr, sd+2*fa)
        base = jnp.dot(feat, w_base,
                       preferred_element_type=jnp.float32)    # (sr, H)

        # Per-agent fc1: tiny K = obs_dim + n_actions correction matmul.
        h1_parts = []
        for a in range(n_agents):
            pa = pa_ref[a, rows, :]                           # (sr, od+nA)
            h1_a = (base
                    + jnp.dot(pa, wpa_ref[a],
                              preferred_element_type=jnp.float32)
                    + b1_bc[a])
            h1_parts.append(jnp.maximum(h1_a, 0.0))

        # Stack agents along rows -> single fc2 / fc3 matmul per sub-tile.
        h1 = jnp.concatenate(h1_parts, axis=0).astype(w2.dtype)   # (na*sr, H)
        h2 = jnp.maximum(
            jnp.dot(h1, w2, preferred_element_type=jnp.float32) + b2_bc, 0.0)
        q = (jnp.dot(h2.astype(w3.dtype), w3,
                     preferred_element_type=jnp.float32) + b3_bc)  # (na*sr,nA)

        # Re-pack to the final row-major layout (row, agent*action) and store
        # once: one lane-denser store, no post-kernel transpose.
        q_tile = jnp.concatenate(
            [q[a * sub_rows:(a + 1) * sub_rows, :] for a in range(n_agents)],
            axis=1)                                            # (sr, na*nA)
        q_ref[rows, :] = q_tile.astype(q_ref.dtype)


# ----------------------------------------------------------------------------
# Full COMACritic forward (t=None branch), fused into one pallas_call
# ----------------------------------------------------------------------------
def coma_critic_forward(params, state, obs, actions_onehot, n_agents,
                        n_actions, *, block_bt=1024, sub_rows=256):
    bs, max_t, state_dim = state.shape
    obs_dim = obs.shape[-1]
    hidden = params["w2"].shape[0]
    f_act = n_agents * n_actions
    bt = bs * max_t
    cdt = jnp.bfloat16   # MXU streaming dtype; accumulation stays f32.

    # ---- shared (agent-independent) row features: [state | actions | last] -
    state_flat = state.reshape(bt, state_dim)
    act_flat = actions_onehot.reshape(bt, f_act)
    last = jnp.concatenate(
        [jnp.zeros_like(actions_onehot[:, 0:1]), actions_onehot[:, :-1]],
        axis=1)                                    # t=None branch
    last_flat = last.reshape(bt, f_act)
    feat = jnp.concatenate([state_flat, act_flat, last_flat],
                           axis=-1).astype(cdt)    # (bt, sd + 2*f_act)
    shared_dim = feat.shape[-1]

    # ---- per-agent row features, agent-major: [obs_a | own_action_a] -------
    pa = jnp.concatenate(
        [obs.reshape(bt, n_agents, obs_dim),
         actions_onehot.reshape(bt, n_agents, n_actions)], axis=-1)
    pa = jnp.transpose(pa, (1, 0, 2)).astype(cdt)   # (na, bt, od + nA)
    pa_dim = obs_dim + n_actions

    # ---- fc1 split by the feature groups produced by _build_inputs ---------
    w1 = params["w1"]                               # (d_in, H)
    o0 = state_dim
    o1 = o0 + obs_dim
    o2 = o1 + f_act
    o3 = o2 + f_act
    w1_s, w1_o = w1[:o0], w1[o0:o1]
    w1_a, w1_l, w1_e = w1[o1:o2], w1[o2:o3], w1[o3:]
    # Shared base weight: [state | actions | last] in one matmul.
    w_base = jnp.concatenate([w1_s, w1_a, w1_l], axis=0).astype(cdt)
    # Per-agent correction weight: obs contribution plus own-action removal.
    w_pa = jnp.concatenate(
        [jnp.broadcast_to(w1_o[None], (n_agents, obs_dim, hidden)),
         -w1_a.reshape(n_agents, n_actions, hidden)],
        axis=1).astype(cdt)                          # (na, od+nA, H)
    # Agent-id one-hot folded into a per-agent fc1 bias (kept f32).
    b1_agent = params["b1"].reshape(1, hidden) + w1_e      # (na, H)
    w2 = params["w2"].astype(cdt)
    w3 = params["w3"].astype(cdt)
    b2 = params["b2"]
    b3 = params["b3"]

    # ---- row tiling ---------------------------------------------------------
    block_bt = max(8, _round_up(min(block_bt, bt), 8))
    # Prefer >= 2 grid steps so ("parallel",) can shard rows across both TCs.
    if bt > 8 and _cdiv(bt, block_bt) < 2:
        block_bt = max(8, _round_up(_cdiv(bt, 2), 8))
    sub_rows = max(8, _round_up(min(sub_rows, block_bt), 8))
    block_bt = _round_up(block_bt, sub_rows)
    bt_pad = _round_up(bt, block_bt)
    if bt_pad != bt:
        feat = jnp.pad(feat, ((0, bt_pad - bt), (0, 0)))
        pa = jnp.pad(pa, ((0, 0), (0, bt_pad - bt), (0, 0)))

    grid = (bt_pad // block_bt,)
    kernel = functools.partial(coma_fused_kernel, sub_rows=sub_rows)

    q_flat = pl.pallas_call(
        kernel,
        out_shape=jax.ShapeDtypeStruct((bt_pad, f_act), jnp.float32),
        grid_spec=pltpu.PrefetchScalarGridSpec(
            num_scalar_prefetch=0,
            grid=grid,
            in_specs=[
                pl.BlockSpec((block_bt, shared_dim), lambda i: (i, 0)),
                pl.BlockSpec((n_agents, block_bt, pa_dim),
                             lambda i: (0, i, 0)),
                pl.BlockSpec((shared_dim, hidden), lambda i: (0, 0)),
                pl.BlockSpec((n_agents, pa_dim, hidden), lambda i: (0, 0, 0)),
                pl.BlockSpec((n_agents, hidden), lambda i: (0, 0)),
                pl.BlockSpec((hidden, hidden), lambda i: (0, 0)),
                pl.BlockSpec((1, hidden), lambda i: (0, 0)),
                pl.BlockSpec((hidden, n_actions), lambda i: (0, 0)),
                pl.BlockSpec((1, n_actions), lambda i: (0, 0)),
            ],
            out_specs=pl.BlockSpec((block_bt, f_act), lambda i: (i, 0)),
        ),
        compiler_params=pltpu.CompilerParams(
            dimension_semantics=("parallel",)),
    )(feat, pa, w_base, w_pa, b1_agent, w2, b2, w3, b3)

    # Output is already in final row-major (row, agent, action) order.
    return q_flat[:bt].reshape(bs, max_t, n_agents, n_actions)


# ----------------------------------------------------------------------------
# Pure-JAX reference (mirrors COMACritic._build_inputs(t=None) + the MLP)
# ----------------------------------------------------------------------------
def build_inputs(state, obs, actions_onehot, n_agents, n_actions):
    bs, max_t = state.shape[0], state.shape[1]
    state_dim = state.shape[-1]

    state_rep = jnp.broadcast_to(state[:, :, None, :],
                                 (bs, max_t, n_agents, state_dim))
    act_flat = actions_onehot.reshape(bs, max_t, 1, n_agents * n_actions)
    act_rep = jnp.broadcast_to(act_flat,
                               (bs, max_t, n_agents, n_agents * n_actions))
    agent_mask = 1.0 - jnp.eye(n_agents, dtype=actions_onehot.dtype)
    agent_mask = jnp.repeat(agent_mask.reshape(-1, 1), n_actions, axis=1)
    agent_mask = agent_mask.reshape(n_agents, n_agents * n_actions)
    masked_actions = act_rep * agent_mask[None, None]
    last = jnp.concatenate(
        [jnp.zeros_like(actions_onehot[:, 0:1]), actions_onehot[:, :-1]],
        axis=1)
    last_rep = jnp.broadcast_to(
        last.reshape(bs, max_t, 1, n_agents * n_actions),
        (bs, max_t, n_agents, n_agents * n_actions))
    agent_id = jnp.broadcast_to(
        jnp.eye(n_agents, dtype=state.dtype)[None, None],
        (bs, max_t, n_agents, n_agents))
    return jnp.concatenate(
        [state_rep, obs, masked_actions, last_rep, agent_id], axis=-1)


def reference_forward(params, state, obs, actions_onehot, n_agents, n_actions):
    inputs = build_inputs(state, obs, actions_onehot, n_agents, n_actions)
    x = jnp.maximum(inputs @ params["w1"] + params["b1"][0], 0.0)
    x = jnp.maximum(x @ params["w2"] + params["b2"][0], 0.0)
    return x @ params["w3"] + params["b3"][0]


def init_params(key, d_in, hidden_dim, n_actions):
    """Deterministic synthetic params. Weights stored as (in, out)."""
    k1, k2, k3, k4, k5, k6 = jax.random.split(key, 6)
    s1 = 1.0 / np.sqrt(d_in)
    s2 = 1.0 / np.sqrt(hidden_dim)
    return {
        "w1": jax.random.uniform(k1, (d_in, hidden_dim), jnp.float32, -s1, s1),
        "b1": jax.random.uniform(k2, (1, hidden_dim), jnp.float32, -s1, s1),
        "w2": jax.random.uniform(k3, (hidden_dim, hidden_dim), jnp.float32,
                                 -s2, s2),
        "b2": jax.random.uniform(k4, (1, hidden_dim), jnp.float32, -s2, s2),
        "w3": jax.random.uniform(k5, (hidden_dim, n_actions), jnp.float32,
                                 -s2, s2),
        "b3": jax.random.uniform(k6, (1, n_actions), jnp.float32, -s2, s2),
    }


if __name__ == "__main__":
    # Small, COMA-consistent shapes.
    bs, max_t = 2, 8
    n_agents, n_actions = 3, 5
    state_shape, obs_shape = 12, 10
    hidden_dim = 32

    # Actually built input width (see NOTE at top).
    d_in = state_shape + obs_shape + 2 * n_agents * n_actions + n_agents

    key = jax.random.PRNGKey(0)
    k_state, k_obs, k_act, k_params = jax.random.split(key, 4)

    state = jax.random.normal(k_state, (bs, max_t, state_shape), jnp.float32)
    obs = jax.random.normal(k_obs, (bs, max_t, n_agents, obs_shape),
                            jnp.float32)
    act_idx = jax.random.randint(k_act, (bs, max_t, n_agents), 0, n_actions)
    actions_onehot = jax.nn.one_hot(act_idx, n_actions, dtype=jnp.float32)
    params = init_params(k_params, d_in, hidden_dim, n_actions)

    # Tolerance note: the kernel streams features/weights through the MXU in
    # bf16 (f32 accumulation) and splits fc1 into per-group matmuls, so
    # rounding / accumulation order differ from the monolithic f32 reference
    # (which itself uses TPU's default reduced matmul precision).
    TOL = 3e-2

    fwd = jax.jit(functools.partial(coma_critic_forward,
                                    n_agents=n_agents, n_actions=n_actions))
    q = jax.block_until_ready(fwd(params, state, obs, actions_onehot))
    q_ref = reference_forward(params, state, obs, actions_onehot, n_agents,
                              n_actions)
    np.testing.assert_allclose(np.asarray(q), np.asarray(q_ref),
                               rtol=TOL, atol=TOL)
    assert q.shape == (bs, max_t, n_agents, n_actions)

    # Second config: exercises a multi-step grid, row padding and the
    # in-kernel sub-tile loop (block_bt=16, sub_rows=8 -> 3 grid steps,
    # 2 sub-tiles per step, 8 padded rows).
    bs2, max_t2 = 4, 10
    k2a, k2b, k2c = jax.random.split(jax.random.PRNGKey(1), 3)
    state2 = jax.random.normal(k2a, (bs2, max_t2, state_shape), jnp.float32)
    obs2 = jax.random.normal(k2b, (bs2, max_t2, n_agents, obs_shape),
                             jnp.float32)
    act_idx2 = jax.random.randint(k2c, (bs2, max_t2, n_agents), 0, n_actions)
    actions_onehot2 = jax.nn.one_hot(act_idx2, n_actions, dtype=jnp.float32)

    fwd2 = jax.jit(functools.partial(coma_critic_forward,
                                     n_agents=n_agents, n_actions=n_actions,
                                     block_bt=16, sub_rows=8))
    q2 = jax.block_until_ready(fwd2(params, state2, obs2, actions_onehot2))
    q2_ref = reference_forward(params, state2, obs2, actions_onehot2,
                               n_agents, n_actions)
    np.testing.assert_allclose(np.asarray(q2), np.asarray(q2_ref),
                               rtol=TOL, atol=TOL)
    assert q2.shape == (bs2, max_t2, n_agents, n_actions)

    print("KERNEL_OK")
</pallas_src>

<mosaic_0001>
module attributes {stable_mosaic.version = 11 : i64} {
  func.func @coma_fused_kernel(%arg0: i32, %arg1: memref<8x42xbf16, #tpu.memory_space<vmem>>, %arg2: memref<3x8x15xbf16, #tpu.memory_space<vmem>>, %arg3: memref<42x32xbf16, #tpu.memory_space<vmem>>, %arg4: memref<3x15x32xbf16, #tpu.memory_space<vmem>>, %arg5: memref<3x32xf32, #tpu.memory_space<vmem>>, %arg6: memref<32x32xbf16, #tpu.memory_space<vmem>>, %arg7: memref<1x32xf32, #tpu.memory_space<vmem>>, %arg8: memref<32x5xbf16, #tpu.memory_space<vmem>>, %arg9: memref<1x5xf32, #tpu.memory_space<vmem>>, %arg10: memref<8x15xf32, #tpu.memory_space<vmem>>) attributes {dimension_semantics = [#tpu.dimension_semantics<parallel>], iteration_bounds = array<i64: 2>, scalar_prefetch = 0 : i64, scratch_operands = 0 : i64, tpu.core_type = #tpu.core_type<tc>, window_params = [{transform_indices = @transform_0, window_bounds = array<i64: 8, 42>}, {transform_indices = @transform_1, window_bounds = array<i64: 3, 8, 15>}, {pipeline_mode = #tpu.pipeline_mode<synchronous>, transform_indices = @transform_2, window_bounds = array<i64: 42, 32>}, {pipeline_mode = #tpu.pipeline_mode<synchronous>, transform_indices = @transform_3, window_bounds = array<i64: 3, 15, 32>}, {pipeline_mode = #tpu.pipeline_mode<synchronous>, transform_indices = @transform_4, window_bounds = array<i64: 3, 32>}, {pipeline_mode = #tpu.pipeline_mode<synchronous>, transform_indices = @transform_5, window_bounds = array<i64: 32, 32>}, {pipeline_mode = #tpu.pipeline_mode<synchronous>, transform_indices = @transform_6, window_bounds = array<i64: 1, 32>}, {pipeline_mode = #tpu.pipeline_mode<synchronous>, transform_indices = @transform_7, window_bounds = array<i64: 32, 5>}, {pipeline_mode = #tpu.pipeline_mode<synchronous>, transform_indices = @transform_8, window_bounds = array<i64: 1, 5>}, {transform_indices = @transform_9, window_bounds = array<i64: 8, 15>}]} {
    %c0 = arith.constant 0 : index
    %c0_0 = arith.constant 0 : index
    %0 = vector.load %arg3[%c0, %c0_0] : memref<42x32xbf16, #tpu.memory_space<vmem>>, vector<42x32xbf16>
    %c0_1 = arith.constant 0 : index
    %c0_2 = arith.constant 0 : index
    %1 = vector.load %arg6[%c0_1, %c0_2] : memref<32x32xbf16, #tpu.memory_space<vmem>>, vector<32x32xbf16>
    %c0_3 = arith.constant 0 : index
    %c0_4 = arith.constant 0 : index
    %2 = vector.load %arg8[%c0_3, %c0_4] : memref<32x5xbf16, #tpu.memory_space<vmem>>, vector<32x5xbf16>
    %c0_5 = arith.constant 0 : index
    %c0_6 = arith.constant 0 : index
    %3 = vector.load %arg5[%c0_5, %c0_6] : memref<3x32xf32, #tpu.memory_space<vmem>>, vector<3x32xf32>
    %4 = vector.extract_strided_slice %3 {offsets = [0, 0], sizes = [1, 32], strides = [1, 1]} : vector<3x32xf32> to vector<1x32xf32>
    %5 = vector.shape_cast %4 : vector<1x32xf32> to vector<1x32xf32>
    %6 = vector.broadcast %5 : vector<1x32xf32> to vector<8x32xf32>
    %7 = vector.extract_strided_slice %3 {offsets = [1, 0], sizes = [1, 32], strides = [1, 1]} : vector<3x32xf32> to vector<1x32xf32>
    %8 = vector.shape_cast %7 : vector<1x32xf32> to vector<1x32xf32>
    %9 = vector.broadcast %8 : vector<1x32xf32> to vector<8x32xf32>
    %10 = vector.extract_strided_slice %3 {offsets = [2, 0], sizes = [1, 32], strides = [1, 1]} : vector<3x32xf32> to vector<1x32xf32>
    %11 = vector.shape_cast %10 : vector<1x32xf32> to vector<1x32xf32>
    %12 = vector.broadcast %11 : vector<1x32xf32> to vector<8x32xf32>
    %c0_7 = arith.constant 0 : index
    %c0_8 = arith.constant 0 : index
    %13 = vector.load %arg7[%c0_7, %c0_8] : memref<1x32xf32, #tpu.memory_space<vmem>>, vector<1x32xf32>
    %14 = vector.shape_cast %13 : vector<1x32xf32> to vector<1x32xf32>
    %15 = vector.broadcast %14 : vector<1x32xf32> to vector<24x32xf32>
    %c0_9 = arith.constant 0 : index
    %c0_10 = arith.constant 0 : index
    %16 = vector.load %arg9[%c0_9, %c0_10] : memref<1x5xf32, #tpu.memory_space<vmem>>, vector<1x5xf32>
    %17 = vector.shape_cast %16 : vector<1x5xf32> to vector<1x5xf32>
    %18 = vector.broadcast %17 : vector<1x5xf32> to vector<24x5xf32>
    %c0_i32 = arith.constant 0 : i32
    %c1_i32 = arith.constant 1 : i32
    %19 = arith.muli %c0_i32, %c1_i32 : i32
    %c0_i32_11 = arith.constant 0 : i32
    %20 = arith.addi %c0_i32_11, %19 : i32
    %c8_i32 = arith.constant 8 : i32
    %21 = arith.muli %20, %c8_i32 : i32
    %22 = tpu.assume_multiple %21, 8 : i32
    %23 = arith.index_cast %22 : i32 to index
    %c0_12 = arith.constant 0 : index
    %24 = vector.load %arg1[%23, %c0_12] : memref<8x42xbf16, #tpu.memory_space<vmem>>, vector<8x42xbf16>
    %cst = arith.constant dense<0.000000e+00> : vector<8x32xf32>
    %25 = tpu.matmul %24, %0, %cst {dimension_numbers = #tpu.dot_dimension_numbers<[1], [0], [0], [1], [0, 0, 1, 1], [], []>} : vector<8x42xbf16>, vector<42x32xbf16>, vector<8x32xf32> -> vector<8x32xf32>
    %c0_13 = arith.constant 0 : index
    %26 = arith.index_cast %22 : i32 to index
    %c0_14 = arith.constant 0 : index
    %27 = vector.load %arg2[%c0_13, %26, %c0_14] : memref<3x8x15xbf16, #tpu.memory_space<vmem>>, vector<1x8x15xbf16>
    %28 = vector.shape_cast %27 : vector<1x8x15xbf16> to vector<8x15xbf16>
    %c0_15 = arith.constant 0 : index
    %c0_16 = arith.constant 0 : index
    %c0_17 = arith.constant 0 : index
    %29 = vector.load %arg4[%c0_15, %c0_16, %c0_17] : memref<3x15x32xbf16, #tpu.memory_space<vmem>>, vector<1x15x32xbf16>
    %30 = vector.shape_cast %29 : vector<1x15x32xbf16> to vector<15x32xbf16>
    %cst_18 = arith.constant dense<0.000000e+00> : vector<8x32xf32>
    %31 = tpu.matmul %28, %30, %cst_18 {dimension_numbers = #tpu.dot_dimension_numbers<[1], [0], [0], [1], [0, 0, 1, 1], [], []>} : vector<8x15xbf16>, vector<15x32xbf16>, vector<8x32xf32> -> vector<8x32xf32>
    %32 = arith.addf %25, %31 : vector<8x32xf32>
    %33 = arith.addf %32, %6 : vector<8x32xf32>
    %cst_19 = arith.constant 0.000000e+00 : f32
    %34 = vector.broadcast %cst_19 : f32 to vector<8x32xf32>
    %35 = arith.maximumf %33, %34 : vector<8x32xf32>
    %c1 = arith.constant 1 : index
    %36 = arith.index_cast %22 : i32 to index
    %c0_20 = arith.constant 0 : index
    %37 = vector.load %arg2[%c1, %36, %c0_20] : memref<3x8x15xbf16, #tpu.memory_space<vmem>>, vector<1x8x15xbf16>
    %38 = vector.shape_cast %37 : vector<1x8x15xbf16> to vector<8x15xbf16>
    %c1_21 = arith.constant 1 : index
    %c0_22 = arith.constant 0 : index
    %c0_23 = arith.constant 0 : index
    %39 = vector.load %arg4[%c1_21, %c0_22, %c0_23] : memref<3x15x32xbf16, #tpu.memory_space<vmem>>, vector<1x15x32xbf16>
    %40 = vector.shape_cast %39 : vector<1x15x32xbf16> to vector<15x32xbf16>
    %cst_24 = arith.constant dense<0.000000e+00> : vector<8x32xf32>
    %41 = tpu.matmul %38, %40, %cst_24 {dimension_numbers = #tpu.dot_dimension_numbers<[1], [0], [0], [1], [0, 0, 1, 1], [], []>} : vector<8x15xbf16>, vector<15x32xbf16>, vector<8x32xf32> -> vector<8x32xf32>
    %42 = arith.addf %25, %41 : vector<8x32xf32>
    %43 = arith.addf %42, %9 : vector<8x32xf32>
    %cst_25 = arith.constant 0.000000e+00 : f32
    %44 = vector.broadcast %cst_25 : f32 to vector<8x32xf32>
    %45 = arith.maximumf %43, %44 : vector<8x32xf32>
    %c2 = arith.constant 2 : index
    %46 = arith.index_cast %22 : i32 to index
    %c0_26 = arith.constant 0 : index
    %47 = vector.load %arg2[%c2, %46, %c0_26] : memref<3x8x15xbf16, #tpu.memory_space<vmem>>, vector<1x8x15xbf16>
    %48 = vector.shape_cast %47 : vector<1x8x15xbf16> to vector<8x15xbf16>
    %c2_27 = arith.constant 2 : index
    %c0_28 = arith.constant 0 : index
    %c0_29 = arith.constant 0 : index
    %49 = vector.load %arg4[%c2_27, %c0_28, %c0_29] : memref<3x15x32xbf16, #tpu.memory_space<vmem>>, vector<1x15x32xbf16>
    %50 = vector.shape_cast %49 : vector<1x15x32xbf16> to vector<15x32xbf16>
    %cst_30 = arith.constant dense<0.000000e+00> : vector<8x32xf32>
    %51 = tpu.matmul %48, %50, %cst_30 {dimension_numbers = #tpu.dot_dimension_numbers<[1], [0], [0], [1], [0, 0, 1, 1], [], []>} : vector<8x15xbf16>, vector<15x32xbf16>, vector<8x32xf32> -> vector<8x32xf32>
    %52 = arith.addf %25, %51 : vector<8x32xf32>
    %53 = arith.addf %52, %12 : vector<8x32xf32>
    %cst_31 = arith.constant 0.000000e+00 : f32
    %54 = vector.broadcast %cst_31 : f32 to vector<8x32xf32>
    %55 = arith.maximumf %53, %54 : vector<8x32xf32>
    %56 = tpu.concatenate %35, %45, %55 in 0 : vector<8x32xf32>, vector<8x32xf32>, vector<8x32xf32> -> vector<24x32xf32>
    %57 = arith.truncf %56 : vector<24x32xf32> to vector<24x32xbf16>
    %cst_32 = arith.constant dense<0.000000e+00> : vector<24x32xf32>
    %58 = tpu.matmul %57, %1, %cst_32 {dimension_numbers = #tpu.dot_dimension_numbers<[1], [0], [0], [1], [0, 0, 1, 1], [], []>} : vector<24x32xbf16>, vector<32x32xbf16>, vector<24x32xf32> -> vector<24x32xf32>
    %59 = arith.addf %58, %15 : vector<24x32xf32>
    %cst_33 = arith.constant 0.000000e+00 : f32
    %60 = vector.broadcast %cst_33 : f32 to vector<24x32xf32>
    %61 = arith.maximumf %59, %60 : vector<24x32xf32>
    %62 = arith.truncf %61 : vector<24x32xf32> to vector<24x32xbf16>
    %cst_34 = arith.constant dense<0.000000e+00> : vector<24x5xf32>
    %63 = tpu.matmul %62, %2, %cst_34 {dimension_numbers = #tpu.dot_dimension_numbers<[1], [0], [0], [1], [0, 0, 1, 1], [], []>} : vector<24x32xbf16>, vector<32x5xbf16>, vector<24x5xf32> -> vector<24x5xf32>
    %64 = arith.addf %63, %18 : vector<24x5xf32>
    %65 = vector.extract_strided_slice %64 {offsets = [0, 0], sizes = [8, 5], strides = [1, 1]} : vector<24x5xf32> to vector<8x5xf32>
    %66 = vector.extract_strided_slice %64 {offsets = [8, 0], sizes = [8, 5], strides = [1, 1]} : vector<24x5xf32> to vector<8x5xf32>
    %67 = vector.extract_strided_slice %64 {offsets = [16, 0], sizes = [8, 5], strides = [1, 1]} : vector<24x5xf32> to vector<8x5xf32>
    %68 = tpu.concatenate %65, %66, %67 in 1 : vector<8x5xf32>, vector<8x5xf32>, vector<8x5xf32> -> vector<8x15xf32>
    %69 = arith.index_cast %22 : i32 to index
    %c0_35 = arith.constant 0 : index
    %70 = vector.load %arg10[%69, %c0_35] : memref<8x15xf32, #tpu.memory_space<vmem>>, vector<8x15xf32>
    tpu.vector_store %arg10[%69, %c0_35], %68 {strides = array<i32>} : memref<8x15xf32, #tpu.memory_space<vmem>>, vector<8x15xf32>,
    %c1_i32_36 = arith.constant 1 : i32
    return
  }
  func.func @transform_0(%arg0: i32) -> (i32, i32) {
    %c0_i32 = arith.constant 0 : i32
    %c0_i32_0 = arith.constant 0 : i32
    return %arg0, %c0_i32 : i32, i32
  }
  func.func @transform_1(%arg0: i32) -> (i32, i32, i32) {
    %c0_i32 = arith.constant 0 : i32
    %c0_i32_0 = arith.constant 0 : i32
    %c0_i32_1 = arith.constant 0 : i32
    return %c0_i32, %arg0, %c0_i32_0 : i32, i32, i32
  }
  func.func @transform_2(%arg0: i32) -> (i32, i32) {
    %c0_i32 = arith.constant 0 : i32
    %c0_i32_0 = arith.constant 0 : i32
    %c0_i32_1 = arith.constant 0 : i32
    return %c0_i32, %c0_i32_0 : i32, i32
  }
  func.func @transform_3(%arg0: i32) -> (i32, i32, i32) {
    %c0_i32 = arith.constant 0 : i32
    %c0_i32_0 = arith.constant 0 : i32
    %c0_i32_1 = arith.constant 0 : i32
    %c0_i32_2 = arith.constant 0 : i32
    return %c0_i32, %c0_i32_0, %c0_i32_1 : i32, i32, i32
  }
  func.func @transform_4(%arg0: i32) -> (i32, i32) {
    %c0_i32 = arith.constant 0 : i32
    %c0_i32_0 = arith.constant 0 : i32
    %c0_i32_1 = arith.constant 0 : i32
    return %c0_i32, %c0_i32_0 : i32, i32
  }
  func.func @transform_5(%arg0: i32) -> (i32, i32) {
    %c0_i32 = arith.constant 0 : i32
    %c0_i32_0 = arith.constant 0 : i32
    %c0_i32_1 = arith.constant 0 : i32
    return %c0_i32, %c0_i32_0 : i32, i32
  }
  func.func @transform_6(%arg0: i32) -> (i32, i32) {
    %c0_i32 = arith.constant 0 : i32
    %c0_i32_0 = arith.constant 0 : i32
    %c0_i32_1 = arith.constant 0 : i32
    return %c0_i32, %c0_i32_0 : i32, i32
  }
  func.func @transform_7(%arg0: i32) -> (i32, i32) {
    %c0_i32 = arith.constant 0 : i32
    %c0_i32_0 = arith.constant 0 : i32
    %c0_i32_1 = arith.constant 0 : i32
    return %c0_i32, %c0_i32_0 : i32, i32
  }
  func.func @transform_8(%arg0: i32) -> (i32, i32) {
    %c0_i32 = arith.constant 0 : i32
    %c0_i32_0 = arith.constant 0 : i32
    %c0_i32_1 = arith.constant 0 : i32
    return %c0_i32, %c0_i32_0 : i32, i32
  }
  func.func @transform_9(%arg0: i32) -> (i32, i32) {
    %c0_i32 = arith.constant 0 : i32
    %c0_i32_0 = arith.constant 0 : i32
    return %arg0, %c0_i32 : i32, i32
  }
}

</mosaic_0001>

<llo_original>
// kernel: coma_critic_forward.1
$region0: #{coma_critic_forward.1}
  #allocation0 [shape = 'u32[]', space=smem, size = 0x4, offset = 0x4, fixed_abs, tag = 'smem constant byte address 0x4 - core index']
  #allocation1 [shape = 'u32[144,128]{1,0:T(1,128)}', space=vmem, size = 0x12000, scoped, tag = 'internal scratch']
  %s0 = inlined_call_operand.vmem [shape: bf16[16,42], index: 0, kind: input, shape index: {}]
  %s1 = inlined_call_operand.vmem [shape: bf16[3,16,15], index: 1, kind: input, shape index: {}]
  %s2 = inlined_call_operand.vmem [shape: bf16[42,32], index: 2, kind: input, shape index: {}]
  %s3 = inlined_call_operand.vmem [shape: bf16[3,15,32], index: 3, kind: input, shape index: {}]
  %s4 = inlined_call_operand.vmem [shape: f32[3,32], index: 4, kind: input, shape index: {}]
  %s5 = inlined_call_operand.vmem [shape: bf16[32,32], index: 5, kind: input, shape index: {}]
  %s6 = inlined_call_operand.vmem [shape: f32[1,32], index: 6, kind: input, shape index: {}]
  %s7 = inlined_call_operand.vmem [shape: bf16[32,5], index: 7, kind: input, shape index: {}]
  %s8 = inlined_call_operand.vmem [shape: f32[1,5], index: 8, kind: input, shape index: {}]
  %s9 = inlined_call_operand.vmem [shape: f32[16,15], index: 9, kind: output, shape index: {}]
  %s10 = sld [smem:[#allocation0]]
  $region110: #{coma_critic_forward.1} parent=0
    _
  %s12 = ssub.s32 1, %s10
  %s13 = scalar_select 0, %s12, %s10
  $region1: #{coma_critic_forward.1} parent=0
    #allocation2 [shape = 'u8[12288]{0}', space=vmem, size = 0x3000, scoped, tag = 'input window, operand 1']
    loop: start=0, step=1, limit=4
    $region2: #{coma_critic_forward.1} parent=1 // loop_pre_header
      _
    $region3: #{coma_critic_forward.1} parent=1 // loop_header
      %s15 = sphi 0, %s19
      %p16 = scmp.ge.s32.totalorder %s15, 4
      %s25 = sphi 0, %s27
      %s28 = sphi 0, %s25
      %s29 = sphi 0, %s28
      %s45 = sphi 0, %s29
      %s51 = sphi 0, %s53
      %s54 = sphi 0, %s51
      %s55 = sphi 0, %s54
      %s71 = sphi 0, %s55
      %s75 = sphi 0, %s75
      %s77 = sphi 0, %s75
      %s78 = sphi 0, %s77
      %s92 = sphi 0, %s78
      %s96 = sphi 0, %s96
      %s98 = sphi 0, %s96
      %s99 = sphi 0, %s98
      %s113 = sphi 0, %s99
      %s117 = sphi 0, %s117
      %s119 = sphi 0, %s117
      %s120 = sphi 0, %s119
      %s134 = sphi 0, %s120
      %s138 = sphi 0, %s138
      %s140 = sphi 0, %s138
      %s141 = sphi 0, %s140
      %s155 = sphi 0, %s141
      %s159 = sphi 0, %s159
      %s161 = sphi 0, %s159
      %s162 = sphi 0, %s161
      %s176 = sphi 0, %s162
      %s180 = sphi 0, %s180
      %s182 = sphi 0, %s180
      %s183 = sphi 0, %s182
      %s197 = sphi 0, %s183
      %s201 = sphi 0, %s201
      %s203 = sphi 0, %s201
      %s204 = sphi 0, %s203
      %s218 = sphi 0, %s204
      %s224 = sphi 0, %s226
      %s227 = sphi 0, %s224
      %s228 = sphi 0, %s227
      %s244 = sphi 0, %s228
    $region4: #{coma_critic_forward.1} parent=1 // loop_header_branch
      %18 = sbr.rel (%p16) target = $region8
    $region5: #{coma_critic_forward.1} parent=1 // loop_body
      %s20 = ssub.s32 %s15, 1
      %s21 = ssub.s32 %s15, 2
      %s22 = sadd.s32 %s15, 1
      %s23 = ssub.s32 %s15, %s22
      %p24 = scmp.eq.s32.totalorder %s23, 0
      %s26 = sadd.s32 %s25, 1
      %s27 = scalar_select %p24, %s25, %s26
      %p30 = pneg %p24
      %p31 = scmp.eq.s32.totalorder %s15, 1
      %p32 = por %p30, %p31
      %p33 = scmp.ne.s32.totalorder %s25, %s28
      %p34 = scmp.eq.s32.totalorder %s15, 0
      %p35 = por %p33, %p34
      %p36 = scmp.ne.s32.totalorder %s25, %s28
      %p37 = scmp.eq.s32.totalorder %s20, 1
      %p38 = por %p36, %p37
      %p39 = scmp.ne.s32.totalorder %s28, %s29
      %p40 = scmp.eq.s32.totalorder %s20, 0
      %p41 = por %p39, %p40
      %p42 = scmp.ne.s32.totalorder %s28, %s29
      %p43 = scmp.eq.s32.totalorder %s21, 1
      %p44 = por %p42, %p43
      %p46 = scmp.ne.s32.totalorder %s29, %s45
      %p47 = scmp.eq.s32.totalorder %s21, 0
      %p48 = por %p46, %p47
      %s49 = ssub.s32 %s15, %s22
      %p50 = scmp.eq.s32.totalorder %s49, 0
      %s52 = sadd.s32 %s51, 1
      %s53 = scalar_select %p50, %s51, %s52
      %p56 = pneg %p50
      %p57 = scmp.eq.s32.totalorder %s15, 1
      %p58 = por %p56, %p57
      %p59 = scmp.ne.s32.totalorder %s51, %s54
      %p60 = scmp.eq.s32.totalorder %s15, 0
      %p61 = por %p59, %p60
      %p62 = scmp.ne.s32.totalorder %s51, %s54
      %p63 = scmp.eq.s32.totalorder %s20, 1
      %p64 = por %p62, %p63
      %p65 = scmp.ne.s32.totalorder %s54, %s55
      %p66 = scmp.eq.s32.totalorder %s20, 0
      %p67 = por %p65, %p66
      %p68 = scmp.ne.s32.totalorder %s54, %s55
      %p69 = scmp.eq.s32.totalorder %s21, 1
      %p70 = por %p68, %p69
      %p72 = scmp.ne.s32.totalorder %s55, %s71
      %p73 = scmp.eq.s32.totalorder %s21, 0
      %p74 = por %p72, %p73
      %s76 = sadd.s32 %s75, 1
      %p79 = scmp.eq.s32.totalorder %s15, 1
      %p80 = scmp.ne.s32.totalorder %s75, %s77
      %p81 = scmp.eq.s32.totalorder %s15, 0
      %p82 = por %p80, %p81
      %p83 = scmp.ne.s32.totalorder %s75, %s77
      %p84 = scmp.eq.s32.totalorder %s20, 1
      %p85 = por %p83, %p84
      %p86 = scmp.ne.s32.totalorder %s77, %s78
      %p87 = scmp.eq.s32.totalorder %s20, 0
      %p88 = por %p86, %p87
      %p89 = scmp.ne.s32.totalorder %s77, %s78
      %p90 = scmp.eq.s32.totalorder %s21, 1
      %p91 = por %p89, %p90
      %p93 = scmp.ne.s32.totalorder %s78, %s92
      %p94 = scmp.eq.s32.totalorder %s21, 0
      %p95 = por %p93, %p94
      %s97 = sadd.s32 %s96, 1
      %p100 = scmp.eq.s32.totalorder %s15, 1
      %p101 = scmp.ne.s32.totalorder %s96, %s98
      %p102 = scmp.eq.s32.totalorder %s15, 0
      %p103 = por %p101, %p102
      %p104 = scmp.ne.s32.totalorder %s96, %s98
      %p105 = scmp.eq.s32.totalorder %s20, 1
      %p106 = por %p104, %p105
      %p107 = scmp.ne.s32.totalorder %s98, %s99
      %p108 = scmp.eq.s32.totalorder %s20, 0
      %p109 = por %p107, %p108
      %p110 = scmp.ne.s32.totalorder %s98, %s99
      %p111 = scmp.eq.s32.totalorder %s21, 1
      %p112 = por %p110, %p111
      %p114 = scmp.ne.s32.totalorder %s99, %s113
      %p115 = scmp.eq.s32.totalorder %s21, 0
      %p116 = por %p114, %p115
      %s118 = sadd.s32 %s117, 1
      %p121 = scmp.eq.s32.totalorder %s15, 1
      %p122 = scmp.ne.s32.totalorder %s117, %s119
      %p123 = scmp.eq.s32.totalorder %s15, 0
      %p124 = por %p122, %p123
      %p125 = scmp.ne.s32.totalorder %s117, %s119
      %p126 = scmp.eq.s32.totalorder %s20, 1
      %p127 = por %p125, %p126
      %p128 = scmp.ne.s32.totalorder %s119, %s120
      %p129 = scmp.eq.s32.totalorder %s20, 0
      %p130 = por %p128, %p129
      %p131 = scmp.ne.s32.totalorder %s119, %s120
      %p132 = scmp.eq.s32.totalorder %s21, 1
      %p133 = por %p131, %p132
      %p135 = scmp.ne.s32.totalorder %s120, %s134
      %p136 = scmp.eq.s32.totalorder %s21, 0
      %p137 = por %p135, %p136
      %s139 = sadd.s32 %s138, 1
      %p142 = scmp.eq.s32.totalorder %s15, 1
      %p143 = scmp.ne.s32.totalorder %s138, %s140
      %p144 = scmp.eq.s32.totalorder %s15, 0
      %p145 = por %p143, %p144
      %p146 = scmp.ne.s32.totalorder %s138, %s140
      %p147 = scmp.eq.s32.totalorder %s20, 1
      %p148 = por %p146, %p147
      %p149 = scmp.ne.s32.totalorder %s140, %s141
      %p150 = scmp.eq.s32.totalorder %s20, 0
      %p151 = por %p149, %p150
      %p152 = scmp.ne.s32.totalorder %s140, %s141
      %p153 = scmp.eq.s32.totalorder %s21, 1
      %p154 = por %p152, %p153
      %p156 = scmp.ne.s32.totalorder %s141, %s155
      %p157 = scmp.eq.s32.totalorder %s21, 0
      %p158 = por %p156, %p157
      %s160 = sadd.s32 %s159, 1
      %p163 = scmp.eq.s32.totalorder %s15, 1
      %p164 = scmp.ne.s32.totalorder %s159, %s161
      %p165 = scmp.eq.s32.totalorder %s15, 0
      %p166 = por %p164, %p165
      %p167 = scmp.ne.s32.totalorder %s159, %s161
      %p168 = scmp.eq.s32.totalorder %s20, 1
      %p169 = por %p167, %p168
      %p170 = scmp.ne.s32.totalorder %s161, %s162
      %p171 = scmp.eq.s32.totalorder %s20, 0
      %p172 = por %p170, %p171
      %p173 = scmp.ne.s32.totalorder %s161, %s162
      %p174 = scmp.eq.s32.totalorder %s21, 1
      %p175 = por %p173, %p174
      %p177 = scmp.ne.s32.totalorder %s162, %s176
      %p178 = scmp.eq.s32.totalorder %s21, 0
      %p179 = por %p177, %p178
      %s181 = sadd.s32 %s180, 1
      %p184 = scmp.eq.s32.totalorder %s15, 1
      %p185 = scmp.ne.s32.totalorder %s180, %s182
      %p186 = scmp.eq.s32.totalorder %s15, 0
      %p187 = por %p185, %p186
      %p188 = scmp.ne.s32.totalorder %s180, %s182
      %p189 = scmp.eq.s32.totalorder %s20, 1
      %p190 = por %p188, %p189
      %p191 = scmp.ne.s32.totalorder %s182, %s183
      %p192 = scmp.eq.s32.totalorder %s20, 0
      %p193 = por %p191, %p192
      %p194 = scmp.ne.s32.totalorder %s182, %s183
      %p195 = scmp.eq.s32.totalorder %s21, 1
      %p196 = por %p194, %p195
      %p198 = scmp.ne.s32.totalorder %s183, %s197
      %p199 = scmp.eq.s32.totalorder %s21, 0
      %p200 = por %p198, %p199
      %s202 = sadd.s32 %s201, 1
      %p205 = scmp.eq.s32.totalorder %s15, 1
      %p206 = scmp.ne.s32.totalorder %s201, %s203
      %p207 = scmp.eq.s32.totalorder %s15, 0
      %p208 = por %p206, %p207
      %p209 = scmp.ne.s32.totalorder %s201, %s203
      %p210 = scmp.eq.s32.totalorder %s20, 1
      %p211 = por %p209, %p210
      %p212 = scmp.ne.s32.totalorder %s203, %s204
      %p213 = scmp.eq.s32.totalorder %s20, 0
      %p214 = por %p212, %p213
      %p215 = scmp.ne.s32.totalorder %s203, %s204
      %p216 = scmp.eq.s32.totalorder %s21, 1
      %p217 = por %p215, %p216
      %p219 = scmp.ne.s32.totalorder %s204, %s218
      %p220 = scmp.eq.s32.totalorder %s21, 0
      %p221 = por %p219, %p220
      %s222 = ssub.s32 %s15, %s22
      %p223 = scmp.eq.s32.totalorder %s222, 0
      %s225 = sadd.s32 %s224, 1
      %s226 = scalar_select %p223, %s224, %s225
      %p229 = pneg %p223
      %p230 = scmp.eq.s32.totalorder %s15, 1
      %p231 = por %p229, %p230
      %p232 = scmp.ne.s32.totalorder %s224, %s227
      %p233 = scmp.eq.s32.totalorder %s15, 0
      %p234 = por %p232, %p233
      %p235 = scmp.ne.s32.totalorder %s224, %s227
      %p236 = scmp.eq.s32.totalorder %s20, 1
      %p237 = por %p235, %p236
      %p238 = scmp.ne.s32.totalorder %s227, %s228
      %p239 = scmp.eq.s32.totalorder %s20, 0
      %p240 = por %p238, %p239
      %p241 = scmp.ne.s32.totalorder %s227, %s228
      %p242 = scmp.eq.s32.totalorder %s21, 1
      %p243 = por %p241, %p242
      %p245 = scmp.ne.s32.totalorder %s228, %s244
      %p246 = scmp.eq.s32.totalorder %s21, 0
      %p247 = por %p245, %p246
      %p248 = scmp.le.s32.totalorder 1, %s15
      %p249 = scmp.lt.s32.totalorder %s15, 3
      %p250 = pnand %p248, %p249
      %p251 = pneg %p250
      // Predicated region
      $region9: #{coma_critic_forward.1} parent=5 // pred_check
        _
      $region10: #{coma_critic_forward.1} parent=5 // pred_check_branch
        %253 = sbr.rel (%p250) target = $region12
      $region11: #{coma_critic_forward.1} parent=5 // pred_region
        %s254 = ssub.s32 %s15, 1
        // Predicated region
        $region13: #{coma_critic_forward.1} parent=11 // pred_check
          %p255 = pneg %p88
        $region14: #{coma_critic_forward.1} parent=11 // pred_check_branch
          %257 = sbr.rel (%p255) target = $region16
        $region15: #{coma_critic_forward.1} parent=11 // pred_region
          _
        $region16: #{coma_critic_forward.1} parent=11 // pred_fallthru
          _
        // Predicated region
        $region17: #{coma_critic_forward.1} parent=11 // pred_check
          %p258 = pneg %p109
        $region18: #{coma_critic_forward.1} parent=11 // pred_check_branch
          %260 = sbr.rel (%p258) target = $region20
        $region19: #{coma_critic_forward.1} parent=11 // pred_region
          _
        $region20: #{coma_critic_forward.1} parent=11 // pred_fallthru
          _
        // Predicated region
        $region21: #{coma_critic_forward.1} parent=11 // pred_check
          %p261 = pneg %p130
        $region22: #{coma_critic_forward.1} parent=11 // pred_check_branch
          %263 = sbr.rel (%p261) target = $region24
        $region23: #{coma_critic_forward.1} parent=11 // pred_region
          _
        $region24: #{coma_critic_forward.1} parent=11 // pred_fallthru
          _
        // Predicated region
        $region25: #{coma_critic_forward.1} parent=11 // pred_check
          %p264 = pneg %p151
        $region26: #{coma_critic_forward.1} parent=11 // pred_check_branch
          %266 = sbr.rel (%p264) target = $region28
        $region27: #{coma_critic_forward.1} parent=11 // pred_region
          _
        $region28: #{coma_critic_forward.1} parent=11 // pred_fallthru
          _
        // Predicated region
        $region29: #{coma_critic_forward.1} parent=11 // pred_check
          %p267 = pneg %p172
        $region30: #{coma_critic_forward.1} parent=11 // pred_check_branch
          %269 = sbr.rel (%p267) target = $region32
        $region31: #{coma_critic_forward.1} parent=11 // pred_region
          _
        $region32: #{coma_critic_forward.1} parent=11 // pred_fallthru
          _
        // Predicated region
        $region33: #{coma_critic_forward.1} parent=11 // pred_check
          %p270 = pneg %p193
        $region34: #{coma_critic_forward.1} parent=11 // pred_check_branch
          %272 = sbr.rel (%p270) target = $region36
        $region35: #{coma_critic_forward.1} parent=11 // pred_region
          _
        $region36: #{coma_critic_forward.1} parent=11 // pred_fallthru
          _
        // Predicated region
        $region37: #{coma_critic_forward.1} parent=11 // pred_check
          %p273 = pneg %p214
        $region38: #{coma_critic_forward.1} parent=11 // pred_check_branch
          %275 = sbr.rel (%p273) target = $region40
        $region39: #{coma_critic_forward.1} parent=11 // pred_region
          _
        $region40: #{coma_critic_forward.1} parent=11 // pred_fallthru
          _
      $region12: #{coma_critic_forward.1} parent=5 // pred_fallthru
        _
      %p276 = scmp.lt.s32.totalorder %s15, 2
      // Predicated region
      $region41: #{coma_critic_forward.1} parent=5 // pred_check
        %p277 = pneg %p276
      $region42: #{coma_critic_forward.1} parent=5 // pred_check_branch
        %279 = sbr.rel (%p277) target = $region44
      $region43: #{coma_critic_forward.1} parent=5 // pred_region
        // Predicated region
        $region45: #{coma_critic_forward.1} parent=43 // pred_check
          %p280 = pneg %p35
        $region46: #{coma_critic_forward.1} parent=43 // pred_check_branch
          %282 = sbr.rel (%p280) target = $region48
        $region47: #{coma_critic_forward.1} parent=43 // pred_region
          %p283 = scmp.lt.s32.totalorder %s15, 1
          %s284 = scalar_select %p283, %s15, 1
          %s285 = smul.addr %s284, 4
          %s286 = scalar_lea.vmem %s0, %s285
        $region48: #{coma_critic_forward.1} parent=43 // pred_fallthru
          _
        // Predicated region
        $region49: #{coma_critic_forward.1} parent=43 // pred_check
          %p287 = pneg %p61
        $region50: #{coma_critic_forward.1} parent=43 // pred_check_branch
          %289 = sbr.rel (%p287) target = $region52
        $region51: #{coma_critic_forward.1} parent=43 // pred_region
          %s290 = sand.u32 %s51, 1
          %s291 = sand.u32 %s51, 1
          %s292 = smul.addr %s291, 12
          %s293 = scalar_lea.vmem [#allocation2], %s292
          %s294 = smul.addr %s15, 4
          %s295 = scalar_lea.vmem %s1, %s294
          // Predicated region
          $region53: #{coma_critic_forward.1} parent=51 // pred_check
            _
          $region54: #{coma_critic_forward.1} parent=51 // pred_check_branch
            %297 = sbr.rel (0) target = $region56
          $region55: #{coma_critic_forward.1} parent=51 // pred_region
            // Predicated region
            $region57: #{coma_critic_forward.1} parent=55 // pred_check
              _
            $region58: #{coma_critic_forward.1} parent=55 // pred_check_branch
              %299 = sbr.rel target = $region60
            $region59: #{coma_critic_forward.1} parent=55 // pred_region
              // Predicated region
              $region72: #{coma_critic_forward.1} parent=59 // pred_check
                _
              $region73: #{coma_critic_forward.1} parent=59 // pred_check_branch
                %318 = sbr.rel (0) target = $region75
              $region74: #{coma_critic_forward.1} parent=59 // pred_region
                loop: start=0, step=1, limit=1
                $region76: #{coma_critic_forward.1} parent=74 // loop_pre_header
                  _
                $region77: #{coma_critic_forward.1} parent=74 // loop_header
                  %s320 = sphi 0, %s324
                  %p321 = scmp.ge.s32.totalorder %s320, 1
                  %s325 = sphi %s295, %s295
                  %s326 = sphi %s293, %s293
                $region78: #{coma_critic_forward.1} parent=74 // loop_header_branch
                  %323 = sbr.rel (%p321) target = $region82
                $region79: #{coma_critic_forward.1} parent=74 // loop_body
                  _
                $region80: #{coma_critic_forward.1} parent=74 // loop_footer
                  %s324 = sadd.s32 1, %s320
                $region81: #{coma_critic_forward.1} parent=74 // loop_footer_branch
                  %319 = sbr.rel target = $region77
                $region82: #{coma_critic_forward.1} parent=74 // loop_exit
                  _
                loop: start=0, step=1, limit=1
                $region83: #{coma_critic_forward.1} parent=74 // loop_pre_header
                  _
                $region84: #{coma_critic_forward.1} parent=74 // loop_header
                  %s329 = sphi 0, %s333
                  %p330 = scmp.ge.s32.totalorder %s329, 1
                  %s334 = sphi %s295, %s295
                  %s335 = sphi %s293, %s293
                $region85: #{coma_critic_forward.1} parent=74 // loop_header_branch
                  %332 = sbr.rel (%p330) target = $region89
                $region86: #{coma_critic_forward.1} parent=74 // loop_body
                  %v336 = vld [vmem:[%s334] sm:$0xf]
                  %337 = vst [vmem:[%s335] sm:$0xf] %v336
                  %v338 = vld [vmem:[%s334 + $0x8] sm:$0xf]
                  %339 = vst [vmem:[%s335 + $0x4] sm:$0xf] %v338
                  %v340 = vld [vmem:[%s334 + $0x10] sm:$0xf]
                  %341 = vst [vmem:[%s335 + $0x8] sm:$0xf] %v340
                $region87: #{coma_critic_forward.1} parent=74 // loop_footer
                  %s333 = sadd.s32 1, %s329
                $region88: #{coma_critic_forward.1} parent=74 // loop_footer_branch
                  %328 = sbr.rel target = $region84
                $region89: #{coma_critic_forward.1} parent=74 // loop_exit
                  _
              $region75: #{coma_critic_forward.1} parent=59 // pred_fallthru
                _
            $region60: #{coma_critic_forward.1} parent=55 // pred_fallthru
              _
            // Predicated region
            $region61: #{coma_critic_forward.1} parent=55 // pred_check
              _
            $region62: #{coma_critic_forward.1} parent=55 // pred_check_branch
              %301 = sbr.rel (0) target = $region64
            $region63: #{coma_critic_forward.1} parent=55 // pred_region
              loop: start=0, step=1, limit=1
              $region65: #{coma_critic_forward.1} parent=63 // loop_pre_header
                _
              $region66: #{coma_critic_forward.1} parent=63 // loop_header
                %s304 = sphi 0, %s308
                %p305 = scmp.ge.s32.totalorder %s304, 1
                %s309 = sphi %s295, %s295
                %s310 = sphi %s293, %s293
              $region67: #{coma_critic_forward.1} parent=63 // loop_header_branch
                %307 = sbr.rel (%p305) target = $region71
              $region68: #{coma_critic_forward.1} parent=63 // loop_body
                %v311 = vld [vmem:[%s309] sm:$0xf]
                %312 = vst [vmem:[%s310] sm:$0xf] %v311
                %v313 = vld [vmem:[%s309 + $0x8] sm:$0xf]
                %314 = vst [vmem:[%s310 + $0x4] sm:$0xf] %v313
                %v315 = vld [vmem:[%s309 + $0x10] sm:$0xf]
                %316 = vst [vmem:[%s310 + $0x8] sm:$0xf] %v315
              $region69: #{coma_critic_forward.1} parent=63 // loop_footer
                %s308 = sadd.s32 1, %s304
              $region70: #{coma_critic_forward.1} parent=63 // loop_footer_branch
                %303 = sbr.rel target = $region66
              $region71: #{coma_critic_forward.1} parent=63 // loop_exit
                _
            $region64: #{coma_critic_forward.1} parent=55 // pred_fallthru
              _
          $region56: #{coma_critic_forward.1} parent=51 // pred_fallthru
            _
          %342 = vnop
        $region52: #{coma_critic_forward.1} parent=43 // pred_fallthru
          _
      $region44: #{coma_critic_forward.1} parent=5 // pred_fallthru
        _
      %p343 = scmp.le.s32.totalorder 1, %s15
      %p344 = scmp.lt.s32.totalorder %s15, 3
      %p345 = pnand %p343, %p344
      %p346 = pneg %p345
      // Predicated region
      $region90: #{coma_critic_forward.1} parent=5 // pred_check
        _
      $region91: #{coma_critic_forward.1} parent=5 // pred_check_branch
        %348 = sbr.rel (%p345) target = $region93
      $region92: #{coma_critic_forward.1} parent=5 // pred_region
        %s349 = ssub.s32 %s15, 1
        %s350 = sand.u32 %s54, 1
        %s351 = sand.u32 %s54, 1
        %s352 = smul.addr %s351, 12
        %s353 = scalar_lea.vmem [#allocation2], %s352
        // Predicated region
        $region94: #{coma_critic_forward.1} parent=92 // pred_check
          %p354 = pneg %p67
        $region95: #{coma_critic_forward.1} parent=92 // pred_check_branch
          %356 = sbr.rel (%p354) target = $region97
        $region96: #{coma_critic_forward.1} parent=92 // pred_region
          _
        $region97: #{coma_critic_forward.1} parent=92 // pred_fallthru
          _
        %p357 = scmp.lt.s32.totalorder %s20, 1
        %s358 = scalar_select %p357, %s20, 1
        %s359 = smul.addr %s358, 4
        %s360 = scalar_lea.vmem %s0, %s359
        %p361 = pneg %p41
        %p362 = pneg %p38
        %s363 = sand.u32 %s54, 1
        %s364 = sand.u32 %s54, 1
        %s365 = smul.addr %s364, 12
        %s366 = scalar_lea.vmem [#allocation2], %s365
        %p367 = pneg %p67
        %p368 = pneg %p64
        %p369 = pneg %p88
        %p370 = pneg %p85
        %p371 = pneg %p109
        %p372 = pneg %p106
        %p373 = pneg %p130
        %p374 = pneg %p127
        %p375 = pneg %p151
        %p376 = pneg %p148
        %p377 = pneg %p172
        %p378 = pneg %p169
        %p379 = pneg %p193
        %p380 = pneg %p190
        %p381 = pneg %p214
        %p382 = pneg %p211
        %p383 = pneg %p240
        %p384 = pneg %p237
        %p385 = scmp.lt.s32.totalorder %s20, 1
        %s386 = scalar_select %p385, %s20, 1
        %s387 = smul.addr %s386, 8
        %s388 = scalar_lea.vmem %s9, %s387
        %p389 = scmp.lt.s32.totalorder %s20, 1
        %s390 = scalar_select %p389, %s20, 1
        %s391 = smul.addr %s390, 4
        %s392 = scalar_lea.vmem %s0, %s391
        %p393 = scmp.lt.s32.totalorder %s20, 1
        %s394 = scalar_select %p393, %s20, 1
        %s395 = smul.addr %s394, 8
        %s396 = scalar_lea.vmem %s9, %s395
        %v398 = vld [vmem:[%s2] sm:$0xf]
        %v399 = vld [vmem:[%s2 + $0x4] sm:$0xf]
        %v400 = vld [vmem:[%s2 + $0x8] sm:$0xf]
        %v401 = vld [vmem:[%s2 + $0xc] sm:$0xf]
        %v402 = vld [vmem:[%s2 + $0x10] sm:$0xf]
        %v403 = vld [vmem:[%s2 + $0x14] sm:$0x1]
        %v404 = vld [vmem:[%s5] sm:$0xf]
        %v405 = vld [vmem:[%s5 + $0x4] sm:$0xf]
        %v406 = vld [vmem:[%s5 + $0x8] sm:$0xf]
        %v407 = vld [vmem:[%s5 + $0xc] sm:$0xf]
        %v408 = vld [vmem:[%s7] sm:$0xf]
        %v409 = vld [vmem:[%s7 + $0x4] sm:$0xf]
        %v410 = vld [vmem:[%s7 + $0x8] sm:$0xf]
        %v411 = vld [vmem:[%s7 + $0xc] sm:$0xf]
        %v412 = vld [vmem:[%s4] sm:$0x7]
        %v413 = vlaneseq
        %v414 = vshrl.u32 %v413, 7
        %v415 = vsub.s32 0, %v414
        %v416 = vrot.slane %v412, %v415
        %v417 = vlaneseq
        %v418 = vshrl.u32 %v417, 7
        %v419 = vsub.s32 1, %v418
        %v420 = vrot.slane %v412, %v419
        %v421 = vlaneseq
        %v422 = vshrl.u32 %v421, 7
        %v423 = vsub.s32 2, %v422
        %v424 = vrot.slane %v412, %v423
        %v425 = vld [vmem:[%s6] sm:$0x1]
        %v427 = vlaneseq
        %v428 = vshrl.u32 %v427, 7
        %v429 = vsub.s32 0, %v428
        %v430 = vrot.slane %v425, %v429
        %v432 = vld [vmem:[%s8] sm:$0x1]
        %v434 = vlaneseq
        %v435 = vshrl.u32 %v434, 7
        %v436 = vsub.s32 0, %v435
        %v437 = vrot.slane %v432, %v436
        %v439 = vld [vmem:[%s392] sm:$0xf]
        %v446 = vunpack.c.l.b16 %v398
        %v447 = vunpack.c.l.b16 %v399
        %v448 = vunpack.c.l.b16 %v400
        %v449 = vunpack.c.l.b16 %v401
        %v450 = vunpack.c.l.b16 %v402
        %v451 = vunpack.c.l.b16 %v403
        %v452 = vpack.c.b16 %v447, %v446
        %v453 = vpack.c.b16 %v449, %v448
        %v454 = vpack.c.b16 %v451, %v450
        %vm457 = vcmask 343040
        %v459 = vsel %vm457, %v439, 0
        %vm461 = vcmask 1044480
        %v463 = vsel %vm461, %v454, 0
        %465 = vmatprep.subr.bf16.mxu0 0
        %466 = vmatpush1.bf16.msra.mxu0 %v452
        %467 = vmatprep.subr.bf16.mxu0 0
        %468 = vmatpush1.bf16.msra.mxu0 %v453
        %469 = vmatprep.subr.bf16.mxu0 0
        %470 = vmatpush1.bf16.msra.mxu0 %v463
        %471 = vmatprep.subr.bf16.mxu0 0
        %472 = vmatpush1.bf16.msra.mxu0 0
        %473 = vmatprep.subr.bf16.mxu0 0
        %474 = vmatpush1.bf16.msra.mxu0 0
        %475 = vmatprep.subr.bf16.mxu0 0
        %476 = vmatpush1.bf16.msra.mxu0 0
        %477 = vmatprep.subr.bf16.mxu0 0
        %478 = vmatpush1.bf16.msra.mxu0 0
        %479 = vmatprep.subr.bf16.mxu0 0
        %480 = vmatpush1.bf16.msra.mxu0 0
        %481 = vmatprep.subr.bf16.mxu0 0
        %482 = vmatpush1.bf16.msra.mxu0 0
        %483 = vmatprep.subr.bf16.mxu0 0
        %484 = vmatpush1.bf16.msra.mxu0 0
        %485 = vmatprep.subr.bf16.mxu0 0
        %486 = vmatpush1.bf16.msra.mxu0 0
        %487 = vmatprep.subr.bf16.mxu0 0
        %488 = vmatpush1.bf16.msra.mxu0 0
        %489 = vmatprep.subr.bf16.mxu0 0
        %490 = vmatpush1.bf16.msra.mxu0 0
        %491 = vmatprep.subr.bf16.mxu0 0
        %492 = vmatpush1.bf16.msra.mxu0 0
        %493 = vmatprep.subr.bf16.mxu0 0
        %494 = vmatpush1.bf16.msra.mxu0 0
        %495 = vmatprep.subr.bf16.mxu0 0
        %496 = vmatpush1.bf16.msra.mxu0 0
        %497 = vmatprep.mubr.bf16.mxu0 0
        %498 = vmatmul.mubr.bf16.gmra.mrb[0].mxu0 %v459
        %v499 = vpop.f32.mrb[0].mxu0
        %v500 = vadd.f32 0.0, %v499
        %v501 = vpop.f32.mrb[0].mxu0
        %v502 = vpop.f32.mrb[0].mxu0
        %v503 = vpop.f32.mrb[0].mxu0
        %504 = vdwg.mxu0
        %v505 = vld [vmem:[%s353] sm:$0xf]
        %v506 = vld [vmem:[%s3] sm:$0xf]
        %v507 = vld [vmem:[%s3 + $0x4] sm:$0xf]
        %v510 = vunpack.c.l.b16 %v506
        %v511 = vunpack.c.l.b16 %v507
        %v512 = vpack.c.b16 %v511, %v510
        %vm513 = vcmask 121856
        %v515 = vsel %vm513, %v505, 0
        %vm517 = vcmask 1046528
        %vm518 = vcmask 1047552
        %v519 = vsel %vm517, 4294967295, 65535
        %v520 = vsel %vm518, %v519, 0
        %v522 = vand.u32 %v512, %v520
        %524 = vmatprep.subr.bf16.mxu0 0
        %525 = vmatpush1.bf16.msra.mxu0 %v522
        %526 = vmatprep.subr.bf16.mxu0 0
        %527 = vmatpush1.bf16.msra.mxu0 0
        %528 = vmatprep.subr.bf16.mxu0 0
        %529 = vmatpush1.bf16.msra.mxu0 0
        %530 = vmatprep.subr.bf16.mxu0 0
        %531 = vmatpush1.bf16.msra.mxu0 0
        %532 = vmatprep.subr.bf16.mxu0 0
        %533 = vmatpush1.bf16.msra.mxu0 0
        %534 = vmatprep.subr.bf16.mxu0 0
        %535 = vmatpush1.bf16.msra.mxu0 0
        %536 = vmatprep.subr.bf16.mxu0 0
        %537 = vmatpush1.bf16.msra.mxu0 0
        %538 = vmatprep.subr.bf16.mxu0 0
        %539 = vmatpush1.bf16.msra.mxu0 0
        %540 = vmatprep.subr.bf16.mxu0 0
        %541 = vmatpush1.bf16.msra.mxu0 0
        %542 = vmatprep.subr.bf16.mxu0 0
        %543 = vmatpush1.bf16.msra.mxu0 0
        %544 = vmatprep.subr.bf16.mxu0 0
        %545 = vmatpush1.bf16.msra.mxu0 0
        %546 = vmatprep.subr.bf16.mxu0 0
        %547 = vmatpush1.bf16.msra.mxu0 0
        %548 = vmatprep.subr.bf16.mxu0 0
        %549 = vmatpush1.bf16.msra.mxu0 0
        %550 = vmatprep.subr.bf16.mxu0 0
        %551 = vmatpush1.bf16.msra.mxu0 0
        %552 = vmatprep.subr.bf16.mxu0 0
        %553 = vmatpush1.bf16.msra.mxu0 0
        %554 = vmatprep.subr.bf16.mxu0 0
        %555 = vmatpush1.bf16.msra.mxu0 0
        %556 = vmatprep.mubr.bf16.mxu0 0
        %557 = vmatmul.mubr.bf16.gmra.mrb[0].mxu0 %v515
        %v558 = vpop.f32.mrb[0].mxu0
        %v559 = vadd.f32 0.0, %v558
        %v560 = vpop.f32.mrb[0].mxu0
        %v561 = vpop.f32.mrb[0].mxu0
        %v562 = vpop.f32.mrb[0].mxu0
        %563 = vdwg.mxu0
        %v564 = vadd.f32 %v500, %v559
        %v565 = vadd.f32 %v564, %v416
        %v566 = vmax.f32 %v565, 0.0
        %s567 = sadd.s32 0, 1
        %s568 = smul.addr %s567, 4
        %s569 = scalar_lea.vmem %s353, %s568 [#allocation2]
        %v570 = vld [vmem:[%s569] sm:$0xf]
        %s571 = scalar_lea.vmem %s3, 8
        %v572 = vld [vmem:[%s571] sm:$0xf]
        %v573 = vld [vmem:[%s571 + $0x4] sm:$0xf]
        %v576 = vunpack.c.l.b16 %v572
        %v577 = vunpack.c.l.b16 %v573
        %v578 = vpack.c.b16 %v577, %v576
        %v580 = vsel %vm513, %v570, 0
        %v583 = vand.u32 %v578, %v520
        %585 = vmatprep.subr.bf16.mxu0 0
        %586 = vmatpush1.bf16.msra.mxu0 %v583
        %587 = vmatprep.subr.bf16.mxu0 0
        %588 = vmatpush1.bf16.msra.mxu0 0
        %589 = vmatprep.subr.bf16.mxu0 0
        %590 = vmatpush1.bf16.msra.mxu0 0
        %591 = vmatprep.subr.bf16.mxu0 0
        %592 = vmatpush1.bf16.msra.mxu0 0
        %593 = vmatprep.subr.bf16.mxu0 0
        %594 = vmatpush1.bf16.msra.mxu0 0
        %595 = vmatprep.subr.bf16.mxu0 0
        %596 = vmatpush1.bf16.msra.mxu0 0
        %597 = vmatprep.subr.bf16.mxu0 0
        %598 = vmatpush1.bf16.msra.mxu0 0
        %599 = vmatprep.subr.bf16.mxu0 0
        %600 = vmatpush1.bf16.msra.mxu0 0
        %601 = vmatprep.subr.bf16.mxu0 0
        %602 = vmatpush1.bf16.msra.mxu0 0
        %603 = vmatprep.subr.bf16.mxu0 0
        %604 = vmatpush1.bf16.msra.mxu0 0
        %605 = vmatprep.subr.bf16.mxu0 0
        %606 = vmatpush1.bf16.msra.mxu0 0
        %607 = vmatprep.subr.bf16.mxu0 0
        %608 = vmatpush1.bf16.msra.mxu0 0
        %609 = vmatprep.subr.bf16.mxu0 0
        %610 = vmatpush1.bf16.msra.mxu0 0
        %611 = vmatprep.subr.bf16.mxu0 0
        %612 = vmatpush1.bf16.msra.mxu0 0
        %613 = vmatprep.subr.bf16.mxu0 0
        %614 = vmatpush1.bf16.msra.mxu0 0
        %615 = vmatprep.subr.bf16.mxu0 0
        %616 = vmatpush1.bf16.msra.mxu0 0
        %617 = vmatprep.mubr.bf16.mxu0 0
        %618 = vmatmul.mubr.bf16.gmra.mrb[0].mxu0 %v580
        %v619 = vpop.f32.mrb[0].mxu0
        %v620 = vadd.f32 0.0, %v619
        %v621 = vpop.f32.mrb[0].mxu0
        %v622 = vpop.f32.mrb[0].mxu0
        %v623 = vpop.f32.mrb[0].mxu0
        %624 = vdwg.mxu0
        %v625 = vadd.f32 %v500, %v620
        %v626 = vadd.f32 %v625, %v420
        %v627 = vmax.f32 %v626, 0.0
        %s628 = sadd.s32 0, 2
        %s629 = smul.addr %s628, 4
        %s630 = scalar_lea.vmem %s353, %s629 [#allocation2]
        %v631 = vld [vmem:[%s630] sm:$0xf]
        %s632 = scalar_lea.vmem %s3, 16
        %v633 = vld [vmem:[%s632] sm:$0xf]
        %v634 = vld [vmem:[%s632 + $0x4] sm:$0xf]
        %v637 = vunpack.c.l.b16 %v633
        %v638 = vunpack.c.l.b16 %v634
        %v639 = vpack.c.b16 %v638, %v637
        %v641 = vsel %vm513, %v631, 0
        %v644 = vand.u32 %v639, %v520
        %646 = vmatprep.subr.bf16.mxu0 0
        %647 = vmatpush1.bf16.msra.mxu0 %v644
        %648 = vmatprep.subr.bf16.mxu0 0
        %649 = vmatpush1.bf16.msra.mxu0 0
        %650 = vmatprep.subr.bf16.mxu0 0
        %651 = vmatpush1.bf16.msra.mxu0 0
        %652 = vmatprep.subr.bf16.mxu0 0
        %653 = vmatpush1.bf16.msra.mxu0 0
        %654 = vmatprep.subr.bf16.mxu0 0
        %655 = vmatpush1.bf16.msra.mxu0 0
        %656 = vmatprep.subr.bf16.mxu0 0
        %657 = vmatpush1.bf16.msra.mxu0 0
        %658 = vmatprep.subr.bf16.mxu0 0
        %659 = vmatpush1.bf16.msra.mxu0 0
        %660 = vmatprep.subr.bf16.mxu0 0
        %661 = vmatpush1.bf16.msra.mxu0 0
        %662 = vmatprep.subr.bf16.mxu0 0
        %663 = vmatpush1.bf16.msra.mxu0 0
        %664 = vmatprep.subr.bf16.mxu0 0
        %665 = vmatpush1.bf16.msra.mxu0 0
        %666 = vmatprep.subr.bf16.mxu0 0
        %667 = vmatpush1.bf16.msra.mxu0 0
        %668 = vmatprep.subr.bf16.mxu0 0
        %669 = vmatpush1.bf16.msra.mxu0 0
        %670 = vmatprep.subr.bf16.mxu0 0
        %671 = vmatpush1.bf16.msra.mxu0 0
        %672 = vmatprep.subr.bf16.mxu0 0
        %673 = vmatpush1.bf16.msra.mxu0 0
        %674 = vmatprep.subr.bf16.mxu0 0
        %675 = vmatpush1.bf16.msra.mxu0 0
        %676 = vmatprep.subr.bf16.mxu0 0
        %677 = vmatpush1.bf16.msra.mxu0 0
        %678 = vmatprep.mubr.bf16.mxu0 0
        %679 = vmatmul.mubr.bf16.gmra.mrb[0].mxu0 %v641
        %v680 = vpop.f32.mrb[0].mxu0
        %v681 = vadd.f32 0.0, %v680
        %v682 = vpop.f32.mrb[0].mxu0
        %v683 = vpop.f32.mrb[0].mxu0
        %v684 = vpop.f32.mrb[0].mxu0
        %685 = vdwg.mxu0
        %v686 = vadd.f32 %v500, %v681
        %v687 = vadd.f32 %v686, %v424
        %v688 = vmax.f32 %v687, 0.0
        %v689 = vpack.c.bf16 %v627, %v566
        %v690 = vpack.c.bf16 %v688, %v688
        %v695 = vunpack.c.l.b16 %v404
        %v696 = vunpack.c.l.b16 %v405
        %v697 = vunpack.c.l.b16 %v406
        %v698 = vunpack.c.l.b16 %v407
        %v699 = vpack.c.b16 %v696, %v695
        %v700 = vpack.c.b16 %v698, %v697
        %vm703 = vcmask 261120
        %v705 = vsel %vm703, %v689, 0
        %v708 = vsel %vm703, %v690, 0
        %710 = vmatprep.subr.bf16.mxu0 0
        %711 = vmatpush1.bf16.msra.mxu0 %v699
        %712 = vmatprep.subr.bf16.mxu0 0
        %713 = vmatpush1.bf16.msra.mxu0 %v700
        %714 = vmatprep.subr.bf16.mxu0 0
        %715 = vmatpush1.bf16.msra.mxu0 0
        %716 = vmatprep.subr.bf16.mxu0 0
        %717 = vmatpush1.bf16.msra.mxu0 0
        %718 = vmatprep.subr.bf16.mxu0 0
        %719 = vmatpush1.bf16.msra.mxu0 0
        %720 = vmatprep.subr.bf16.mxu0 0
        %721 = vmatpush1.bf16.msra.mxu0 0
        %722 = vmatprep.subr.bf16.mxu0 0
        %723 = vmatpush1.bf16.msra.mxu0 0
        %724 = vmatprep.subr.bf16.mxu0 0
        %725 = vmatpush1.bf16.msra.mxu0 0
        %726 = vmatprep.subr.bf16.mxu0 0
        %727 = vmatpush1.bf16.msra.mxu0 0
        %728 = vmatprep.subr.bf16.mxu0 0
        %729 = vmatpush1.bf16.msra.mxu0 0
        %730 = vmatprep.subr.bf16.mxu0 0
        %731 = vmatpush1.bf16.msra.mxu0 0
        %732 = vmatprep.subr.bf16.mxu0 0
        %733 = vmatpush1.bf16.msra.mxu0 0
        %734 = vmatprep.subr.bf16.mxu0 0
        %735 = vmatpush1.bf16.msra.mxu0 0
        %736 = vmatprep.subr.bf16.mxu0 0
        %737 = vmatpush1.bf16.msra.mxu0 0
        %738 = vmatprep.subr.bf16.mxu0 0
        %739 = vmatpush1.bf16.msra.mxu0 0
        %740 = vmatprep.subr.bf16.mxu0 0
        %741 = vmatpush1.bf16.msra.mxu0 0
        %742 = vmatprep.mubr.bf16.mxu0 0
        %743 = vmatmul.mubr.bf16.gmra.mrb[0].mxu0 %v705
        %v744 = vpop.f32.mrb[0].mxu0
        %v745 = vadd.f32 %v430, %v744
        %v746 = vpop.f32.mrb[0].mxu0
        %v747 = vpop.f32.mrb[0].mxu0
        %v748 = vadd.f32 %v430, %v747
        %v749 = vpop.f32.mrb[0].mxu0
        %750 = vmatprep.mubr.bf16.mxu0 0
        %751 = vmatmul.mubr.bf16.gmra.mrb[0].mxu0 %v708
        %v752 = vpop.f32.mrb[0].mxu0
        %v753 = vadd.f32 %v430, %v752
        %v754 = vpop.f32.mrb[0].mxu0
        %v755 = vpop.f32.mrb[0].mxu0
        %v756 = vpop.f32.mrb[0].mxu0
        %757 = vdwg.mxu0
        %v758 = vmax.f32 %v745, 0.0
        %v759 = vmax.f32 %v748, 0.0
        %v760 = vmax.f32 %v753, 0.0
        %v761 = vpack.c.bf16 %v759, %v758
        %v762 = vpack.c.bf16 %v760, %v760
        %v767 = vunpack.c.l.b16 %v408
        %v768 = vunpack.c.l.b16 %v409
        %v769 = vunpack.c.l.b16 %v410
        %v770 = vunpack.c.l.b16 %v411
        %v771 = vpack.c.b16 %v768, %v767
        %v772 = vpack.c.b16 %v770, %v769
        %v776 = vsel %vm703, %v761, 0
        %v779 = vsel %vm703, %v762, 0
        %781 = vmatprep.subr.bf16.mxu0 0
        %782 = vmatpush1.bf16.msra.mxu0 %v771
        %783 = vmatprep.subr.bf16.mxu0 0
        %784 = vmatpush1.bf16.msra.mxu0 %v772
        %785 = vmatprep.subr.bf16.mxu0 0
        %786 = vmatpush1.bf16.msra.mxu0 0
        %787 = vmatprep.subr.bf16.mxu0 0
        %788 = vmatpush1.bf16.msra.mxu0 0
        %789 = vmatprep.subr.bf16.mxu0 0
        %790 = vmatpush1.bf16.msra.mxu0 0
        %791 = vmatprep.subr.bf16.mxu0 0
        %792 = vmatpush1.bf16.msra.mxu0 0
        %793 = vmatprep.subr.bf16.mxu0 0
        %794 = vmatpush1.bf16.msra.mxu0 0
        %795 = vmatprep.subr.bf16.mxu0 0
        %796 = vmatpush1.bf16.msra.mxu0 0
        %797 = vmatprep.subr.bf16.mxu0 0
        %798 = vmatpush1.bf16.msra.mxu0 0
        %799 = vmatprep.subr.bf16.mxu0 0
        %800 = vmatpush1.bf16.msra.mxu0 0
        %801 = vmatprep.subr.bf16.mxu0 0
        %802 = vmatpush1.bf16.msra.mxu0 0
        %803 = vmatprep.subr.bf16.mxu0 0
        %804 = vmatpush1.bf16.msra.mxu0 0
        %805 = vmatprep.subr.bf16.mxu0 0
        %806 = vmatpush1.bf16.msra.mxu0 0
        %807 = vmatprep.subr.bf16.mxu0 0
        %808 = vmatpush1.bf16.msra.mxu0 0
        %809 = vmatprep.subr.bf16.mxu0 0
        %810 = vmatpush1.bf16.msra.mxu0 0
        %811 = vmatprep.subr.bf16.mxu0 0
        %812 = vmatpush1.bf16.msra.mxu0 0
        %813 = vmatprep.mubr.bf16.mxu0 0
        %814 = vmatmul.mubr.bf16.gmra.mrb[0].mxu0 %v776
        %v815 = vpop.f32.mrb[0].mxu0
        %v816 = vadd.f32 %v437, %v815
        %v817 = vpop.f32.mrb[0].mxu0
        %v818 = vpop.f32.mrb[0].mxu0
        %v819 = vadd.f32 %v437, %v818
        %v820 = vpop.f32.mrb[0].mxu0
        %821 = vmatprep.mubr.bf16.mxu0 0
        %822 = vmatmul.mubr.bf16.gmra.mrb[0].mxu0 %v779
        %v823 = vpop.f32.mrb[0].mxu0
        %v824 = vadd.f32 %v437, %v823
        %v825 = vpop.f32.mrb[0].mxu0
        %v826 = vpop.f32.mrb[0].mxu0
        %v827 = vpop.f32.mrb[0].mxu0
        %828 = vdwg.mxu0
        %830 = vrot.lane.b32.xlu0 %v819, 5
        %v831 = vpop.permute.xlu0 %830
        %834 = vrot.lane.b32.xlu0 %v824, 10
        %v835 = vpop.permute.xlu0 %834
        %vm837 = vcmask 39936
        %v838 = vsel %vm837, %v816, %v831
        %vm839 = vcmask 80896
        %v840 = vsel %vm839, %v838, %v835
        %841 = vst.msk [vmem:[%s396] sm:$0xff] %vm513, %v840
        %p842 = scmp.lt.s32.totalorder %s20, 1
        %s843 = scalar_select %p842, %s20, 1
        %s844 = smul.addr %s843, 8
        %s845 = scalar_lea.vmem %s9, %s844
        // Predicated region
        $region98: #{coma_critic_forward.1} parent=92 // pred_check
          %p846 = pneg %p237
        $region99: #{coma_critic_forward.1} parent=92 // pred_check_branch
          %848 = sbr.rel (%p846) target = $region101
        $region100: #{coma_critic_forward.1} parent=92 // pred_region
          _
        $region101: #{coma_critic_forward.1} parent=92 // pred_fallthru
          _
      $region93: #{coma_critic_forward.1} parent=5 // pred_fallthru
        _
      %p849 = scmp.le.s32.totalorder 2, %s15
      // Predicated region
      $region102: #{coma_critic_forward.1} parent=5 // pred_check
        %p850 = pneg %p849
      $region103: #{coma_critic_forward.1} parent=5 // pred_check_branch
        %852 = sbr.rel (%p850) target = $region105
      $region104: #{coma_critic_forward.1} parent=5 // pred_region
        %s853 = ssub.s32 %s15, 2
        // Predicated region
        $region106: #{coma_critic_forward.1} parent=104 // pred_check
          %p854 = pneg %p243
        $region107: #{coma_critic_forward.1} parent=104 // pred_check_branch
          %856 = sbr.rel (%p854) target = $region109
        $region108: #{coma_critic_forward.1} parent=104 // pred_region
          %p857 = scmp.lt.s32.totalorder %s21, 1
          %s858 = scalar_select %p857, %s21, 1
          %s859 = smul.addr %s858, 8
          %s860 = scalar_lea.vmem %s9, %s859
        $region109: #{coma_critic_forward.1} parent=104 // pred_fallthru
          _
      $region105: #{coma_critic_forward.1} parent=5 // pred_fallthru
        _
    $region6: #{coma_critic_forward.1} parent=1 // loop_footer
      %s19 = sadd.s32 1, %s15
    $region7: #{coma_critic_forward.1} parent=1 // loop_footer_branch
      %14 = sbr.rel target = $region3
    $region8: #{coma_critic_forward.1} parent=1 // loop_exit
      _

</llo_original>
